<compile_context>
chip_gen: v6e
topology: v6e:2x2x1
jax: 0.10.0
libtpu: 0.0.40
codegen_flags: <defaults>
</compile_context>

<pallas_src>
import jax
import jax.numpy as jnp
from jax import lax
from jax.experimental import pallas as pl
from jax.experimental.pallas import tpu as pltpu


def _round_up(v, m):
    return (v + m - 1) // m * m


def _convblock_kernel(x_ref, w1_ref, b1_ref, w2_ref, b2_ref, w3_ref, b3_ref,
                      wp_ref, bp_ref, o_ref):
    """Fused residual conv block for a block of Bt batch elements.

    x_ref : (Bt, C_in_p, L_pad)   NCL, zero padded along L by k//2 each side
    w*_ref: (C_out_i, k*C_in_i)   im2col-flattened taps;  b*_ref: (C_out_i, 1)
    wp_ref: (C_out, C_in_p)       1x1 projection;         bp_ref: (C_out, 1)
    o_ref : (Bt, C_out, L)        output, PyTorch NCL layout (lane-dense in L)
    """
    bt, c_in, l_pad = x_ref.shape
    out_ch, L = o_ref.shape[1], o_ref.shape[2]
    k = w1_ref.shape[1] // c_in
    pad = (k - 1) // 2

    # Hoisted once per grid step: weights, biases and the valid-column mask.
    w1, b1 = w1_ref[...], b1_ref[...]
    w2, b2 = w2_ref[...], b2_ref[...]
    w3, b3 = w3_ref[...], b3_ref[...]
    wp, bp = wp_ref[...], bp_ref[...]
    col = lax.broadcasted_iota(jnp.int32, (1, l_pad), 1)
    centre = jnp.logical_and(col >= pad, col < pad + L).astype(jnp.float32)

    def conv_same(z, w, b):
        # z: (C, L_pad) with zero pad columns.  One matmul, contraction = k*C.
        taps = [z if t == pad else
                pltpu.roll(z, shift=(pad - t) % l_pad, axis=1)
                for t in range(k)]
        zi = jnp.concatenate(taps, axis=0) if k > 1 else taps[0]
        return jnp.dot(w, zi, preferred_element_type=jnp.float32) + b

    for b in range(bt):                       # static unroll over batch block
        x = x_ref[b]                          # (C_in_p, L_pad)
        # projection shortcut (1x1 conv) - positionwise, no padding concerns.
        s = jnp.dot(wp, x, preferred_element_type=jnp.float32) + bp
        # c1/c2 + relu; re-zero the pad columns so the next 'same' conv sees
        # proper zero padding (replaces the old VMEM pad_scr round trip).
        h = jnp.maximum(conv_same(x, w1, b1), 0.0) * centre
        h = jnp.maximum(conv_same(h, w2, b2), 0.0) * centre
        # c3 (pad columns are garbage but never written out).
        h = conv_same(h, w3, b3)
        y = jnp.maximum(h + s, 0.0)           # (C_out, L_pad)
        o_ref[b, :, :] = y[:, pad:pad + L].astype(o_ref.dtype)


def _auto_block_batch(B, c_in_p, l_pad, out_ch, L, budget_bytes=8 << 20):
    # in/out blocks are double-buffered by the Pallas pipeline; keep them well
    # inside the scoped-VMEM budget (v7x: 64 MiB physical, 32 MiB default).
    per_elem = 4 * 2 * (c_in_p * l_pad + out_ch * L)
    return int(max(1, min(B, 8, budget_bytes // max(per_elem, 1))))


def conv_block_pallas(x_ncl, params, block_batch=None):
    """x_ncl: (B, C_in, L) float32 (PyTorch Conv1d NCL). Returns (B, out, L)."""
    w1, b1, w2, b2, w3, b3, wp, bp = params
    B, C_in, L = x_ncl.shape
    mid, _, k = w1.shape
    out_ch = w3.shape[0]
    assert k % 2 == 1, "only odd kernel sizes (PyTorch 'same' symmetric pad)"
    pad = k // 2
    l_pad = L + 2 * pad

    # channel counts rounded to the 8-sublane tile so the in-kernel im2col
    # concat is tile aligned; the padded weights / channels are zero.
    c_in_p = _round_up(C_in, 8)
    mid_p = _round_up(mid, 8)

    Bt = block_batch if block_batch is not None else _auto_block_batch(
        B, c_in_p, l_pad, out_ch, L)
    B_pad = _round_up(B, Bt)

    # Single glue copy (no transposes): pad batch (to a Bt multiple), channels
    # (to the 8-sublane tile) and length (k//2 zeros each side for 'same').
    x_prep = jnp.pad(x_ncl, ((0, B_pad - B), (0, c_in_p - C_in), (pad, pad)))

    # weights (C_out, C_in, k) -> (C_out_p, k*C_in_p); column index t*C_in_p+c
    # matches the in-kernel tap concatenation order.
    def wflat(w, co_p, ci_p):
        co, ci, kk = w.shape
        w = jnp.pad(w, ((0, co_p - co), (0, ci_p - ci), (0, 0)))
        return jnp.transpose(w, (0, 2, 1)).reshape(co_p, kk * ci_p)

    def bcol(b_, co_p):
        return jnp.pad(b_, (0, co_p - b_.shape[0])).reshape(co_p, 1)

    w1f = wflat(w1, mid_p, c_in_p)
    w2f = wflat(w2, mid_p, mid_p)
    w3f = wflat(w3, out_ch, mid_p)
    wpf = jnp.pad(wp[:, :, 0], ((0, 0), (0, c_in_p - C_in)))     # (out, c_in_p)
    b1f, b2f = bcol(b1, mid_p), bcol(b2, mid_p)
    b3f, bpf = b3.reshape(out_ch, 1), bp.reshape(out_ch, 1)

    full = lambda a: pl.BlockSpec(a.shape, lambda i: (0,) * a.ndim)

    grid_spec = pltpu.PrefetchScalarGridSpec(
        num_scalar_prefetch=0,
        grid=(B_pad // Bt,),
        in_specs=[
            pl.BlockSpec((Bt, c_in_p, l_pad), lambda i: (i, 0, 0)),   # x block
            full(w1f), full(b1f), full(w2f), full(b2f),
            full(w3f), full(b3f), full(wpf), full(bpf),
        ],
        out_specs=pl.BlockSpec((Bt, out_ch, L), lambda i: (i, 0, 0)),
    )

    y = pl.pallas_call(
        _convblock_kernel,
        out_shape=jax.ShapeDtypeStruct((B_pad, out_ch, L), jnp.float32),
        grid_spec=grid_spec,
        compiler_params=pltpu.CompilerParams(
            dimension_semantics=("parallel",)),   # batch blocks independent
    )(x_prep, w1f, b1f, w2f, b2f, w3f, b3f, wpf, bpf)

    return y[:B]          # already (B, out, L) == PyTorch NCL, no transpose


# ----------------------- pure-JAX reference (for checking) -----------------
def _conv1d_same_ref(x_ncl, w, b):
    y = jax.lax.conv_general_dilated(
        x_ncl, w, window_strides=(1,), padding="SAME",
        dimension_numbers=("NCH", "OIH", "NCH"))
    return y + b[None, :, None]


def conv_block_ref(x_ncl, params):
    w1, b1, w2, b2, w3, b3, wp, bp = params
    s = _conv1d_same_ref(x_ncl, wp, bp)
    h = jax.nn.relu(_conv1d_same_ref(x_ncl, w1, b1))
    h = jax.nn.relu(_conv1d_same_ref(h, w2, b2))
    h = _conv1d_same_ref(h, w3, b3)
    return jax.nn.relu(h + s)


if __name__ == "__main__":
    # Small shapes consistent with ConvBlock(in_ch=4, mid=8, out=16, k=3).
    B, C_IN, MID, OUT, K, L = 2, 4, 8, 16, 3, 16

    key = jax.random.PRNGKey(0)
    ks = jax.random.split(key, 9)
    init = lambda k_, shape, fan_in: (
        jax.random.uniform(k_, shape, jnp.float32, -1.0, 1.0)
        / jnp.sqrt(jnp.float32(fan_in)))

    w1 = init(ks[0], (MID, C_IN, K), C_IN * K)
    b1 = init(ks[1], (MID,), C_IN * K)
    w2 = init(ks[2], (MID, MID, K), MID * K)
    b2 = init(ks[3], (MID,), MID * K)
    w3 = init(ks[4], (OUT, MID, K), MID * K)
    b3 = init(ks[5], (OUT,), MID * K)
    wp = init(ks[6], (OUT, C_IN, 1), C_IN)
    bp = init(ks[7], (OUT,), C_IN)
    params = (w1, b1, w2, b2, w3, b3, wp, bp)

    x = jax.random.normal(ks[8], (B, C_IN, L), jnp.float32)   # PyTorch NCL

    y = conv_block_pallas(x, params)
    y = jax.block_until_ready(y)

    y_ref = conv_block_ref(x, params)
    assert y.shape == (B, OUT, L)
    assert jnp.allclose(y, y_ref, atol=2e-5, rtol=2e-5), "mismatch vs reference"

    print("KERNEL_OK")
</pallas_src>

<mosaic_0001>
module attributes {stable_mosaic.version = 11 : i64} {
  func.func @_convblock_kernel(%arg0: i32, %arg1: memref<2x8x18xf32, #tpu.memory_space<vmem>>, %arg2: memref<8x24xf32, #tpu.memory_space<vmem>>, %arg3: memref<8x1xf32, #tpu.memory_space<vmem>>, %arg4: memref<8x24xf32, #tpu.memory_space<vmem>>, %arg5: memref<8x1xf32, #tpu.memory_space<vmem>>, %arg6: memref<16x24xf32, #tpu.memory_space<vmem>>, %arg7: memref<16x1xf32, #tpu.memory_space<vmem>>, %arg8: memref<16x8xf32, #tpu.memory_space<vmem>>, %arg9: memref<16x1xf32, #tpu.memory_space<vmem>>, %arg10: memref<2x16x16xf32, #tpu.memory_space<vmem>>) attributes {dimension_semantics = [#tpu.dimension_semantics<parallel>], iteration_bounds = array<i64: 1>, scalar_prefetch = 0 : i64, scratch_operands = 0 : i64, tpu.core_type = #tpu.core_type<tc>, window_params = [{transform_indices = @transform_0, window_bounds = array<i64: 2, 8, 18>}, {pipeline_mode = #tpu.pipeline_mode<synchronous>, transform_indices = @transform_1, window_bounds = array<i64: 8, 24>}, {pipeline_mode = #tpu.pipeline_mode<synchronous>, transform_indices = @transform_2, window_bounds = array<i64: 8, 1>}, {pipeline_mode = #tpu.pipeline_mode<synchronous>, transform_indices = @transform_3, window_bounds = array<i64: 8, 24>}, {pipeline_mode = #tpu.pipeline_mode<synchronous>, transform_indices = @transform_4, window_bounds = array<i64: 8, 1>}, {pipeline_mode = #tpu.pipeline_mode<synchronous>, transform_indices = @transform_5, window_bounds = array<i64: 16, 24>}, {pipeline_mode = #tpu.pipeline_mode<synchronous>, transform_indices = @transform_6, window_bounds = array<i64: 16, 1>}, {pipeline_mode = #tpu.pipeline_mode<synchronous>, transform_indices = @transform_7, window_bounds = array<i64: 16, 8>}, {pipeline_mode = #tpu.pipeline_mode<synchronous>, transform_indices = @transform_8, window_bounds = array<i64: 16, 1>}, {transform_indices = @transform_9, window_bounds = array<i64: 2, 16, 16>}]} {
    %c0 = arith.constant 0 : index
    %c0_0 = arith.constant 0 : index
    %0 = vector.load %arg2[%c0, %c0_0] : memref<8x24xf32, #tpu.memory_space<vmem>>, vector<8x24xf32>
    %c0_1 = arith.constant 0 : index
    %c0_2 = arith.constant 0 : index
    %1 = vector.load %arg3[%c0_1, %c0_2] : memref<8x1xf32, #tpu.memory_space<vmem>>, vector<8x1xf32>
    %c0_3 = arith.constant 0 : index
    %c0_4 = arith.constant 0 : index
    %2 = vector.load %arg4[%c0_3, %c0_4] : memref<8x24xf32, #tpu.memory_space<vmem>>, vector<8x24xf32>
    %c0_5 = arith.constant 0 : index
    %c0_6 = arith.constant 0 : index
    %3 = vector.load %arg5[%c0_5, %c0_6] : memref<8x1xf32, #tpu.memory_space<vmem>>, vector<8x1xf32>
    %c0_7 = arith.constant 0 : index
    %c0_8 = arith.constant 0 : index
    %4 = vector.load %arg6[%c0_7, %c0_8] : memref<16x24xf32, #tpu.memory_space<vmem>>, vector<16x24xf32>
    %c0_9 = arith.constant 0 : index
    %c0_10 = arith.constant 0 : index
    %5 = vector.load %arg7[%c0_9, %c0_10] : memref<16x1xf32, #tpu.memory_space<vmem>>, vector<16x1xf32>
    %c0_11 = arith.constant 0 : index
    %c0_12 = arith.constant 0 : index
    %6 = vector.load %arg8[%c0_11, %c0_12] : memref<16x8xf32, #tpu.memory_space<vmem>>, vector<16x8xf32>
    %c0_13 = arith.constant 0 : index
    %c0_14 = arith.constant 0 : index
    %7 = vector.load %arg9[%c0_13, %c0_14] : memref<16x1xf32, #tpu.memory_space<vmem>>, vector<16x1xf32>
    %8 = tpu.iota {dimensions = array<i32: 1>} : vector<1x18xi32>
    %c1_i32 = arith.constant 1 : i32
    %9 = vector.broadcast %c1_i32 : i32 to vector<1x18xi32>
    %10 = arith.cmpi sge, %8, %9 : vector<1x18xi32>
    %c17_i32 = arith.constant 17 : i32
    %11 = vector.broadcast %c17_i32 : i32 to vector<1x18xi32>
    %12 = arith.cmpi slt, %8, %11 : vector<1x18xi32>
    %13 = arith.andi %10, %12 : vector<1x18xi1>
    %14 = arith.extui %13 : vector<1x18xi1> to vector<1x18xi32>
    %15 = arith.sitofp %14 : vector<1x18xi32> to vector<1x18xf32>
    %c0_15 = arith.constant 0 : index
    %c0_16 = arith.constant 0 : index
    %c0_17 = arith.constant 0 : index
    %16 = vector.load %arg1[%c0_15, %c0_16, %c0_17] : memref<2x8x18xf32, #tpu.memory_space<vmem>>, vector<1x8x18xf32>
    %17 = vector.shape_cast %16 : vector<1x8x18xf32> to vector<8x18xf32>
    %cst = arith.constant dense<0.000000e+00> : vector<16x18xf32>
    %18 = tpu.matmul %6, %17, %cst {dimension_numbers = #tpu.dot_dimension_numbers<[1], [0], [0], [1], [0, 0, 1, 1], [], []>} : vector<16x8xf32>, vector<8x18xf32>, vector<16x18xf32> -> vector<16x18xf32>
    %19 = vector.broadcast %7 : vector<16x1xf32> to vector<16x18xf32>
    %20 = arith.addf %18, %19 : vector<16x18xf32>
    %c1_i32_18 = arith.constant 1 : i32
    %21 = tpu.dynamic_rotate %17 by %c1_i32_18 dim 1 : vector<8x18xf32>, i32 -> vector<8x18xf32>
    %c17_i32_19 = arith.constant 17 : i32
    %22 = tpu.dynamic_rotate %17 by %c17_i32_19 dim 1 : vector<8x18xf32>, i32 -> vector<8x18xf32>
    %23 = tpu.concatenate %21, %17, %22 in 0 : vector<8x18xf32>, vector<8x18xf32>, vector<8x18xf32> -> vector<24x18xf32>
    %cst_20 = arith.constant dense<0.000000e+00> : vector<8x18xf32>
    %24 = tpu.matmul %0, %23, %cst_20 {dimension_numbers = #tpu.dot_dimension_numbers<[1], [0], [0], [1], [0, 0, 1, 1], [], []>} : vector<8x24xf32>, vector<24x18xf32>, vector<8x18xf32> -> vector<8x18xf32>
    %25 = vector.broadcast %1 : vector<8x1xf32> to vector<8x18xf32>
    %26 = arith.addf %24, %25 : vector<8x18xf32>
    %cst_21 = arith.constant 0.000000e+00 : f32
    %27 = vector.broadcast %cst_21 : f32 to vector<8x18xf32>
    %28 = arith.maximumf %26, %27 : vector<8x18xf32>
    %29 = vector.broadcast %15 : vector<1x18xf32> to vector<8x18xf32>
    %30 = arith.mulf %28, %29 : vector<8x18xf32>
    %c1_i32_22 = arith.constant 1 : i32
    %31 = tpu.dynamic_rotate %30 by %c1_i32_22 dim 1 : vector<8x18xf32>, i32 -> vector<8x18xf32>
    %c17_i32_23 = arith.constant 17 : i32
    %32 = tpu.dynamic_rotate %30 by %c17_i32_23 dim 1 : vector<8x18xf32>, i32 -> vector<8x18xf32>
    %33 = tpu.concatenate %31, %30, %32 in 0 : vector<8x18xf32>, vector<8x18xf32>, vector<8x18xf32> -> vector<24x18xf32>
    %cst_24 = arith.constant dense<0.000000e+00> : vector<8x18xf32>
    %34 = tpu.matmul %2, %33, %cst_24 {dimension_numbers = #tpu.dot_dimension_numbers<[1], [0], [0], [1], [0, 0, 1, 1], [], []>} : vector<8x24xf32>, vector<24x18xf32>, vector<8x18xf32> -> vector<8x18xf32>
    %35 = vector.broadcast %3 : vector<8x1xf32> to vector<8x18xf32>
    %36 = arith.addf %34, %35 : vector<8x18xf32>
    %cst_25 = arith.constant 0.000000e+00 : f32
    %37 = vector.broadcast %cst_25 : f32 to vector<8x18xf32>
    %38 = arith.maximumf %36, %37 : vector<8x18xf32>
    %39 = vector.broadcast %15 : vector<1x18xf32> to vector<8x18xf32>
    %40 = arith.mulf %38, %39 : vector<8x18xf32>
    %c1_i32_26 = arith.constant 1 : i32
    %41 = tpu.dynamic_rotate %40 by %c1_i32_26 dim 1 : vector<8x18xf32>, i32 -> vector<8x18xf32>
    %c17_i32_27 = arith.constant 17 : i32
    %42 = tpu.dynamic_rotate %40 by %c17_i32_27 dim 1 : vector<8x18xf32>, i32 -> vector<8x18xf32>
    %43 = tpu.concatenate %41, %40, %42 in 0 : vector<8x18xf32>, vector<8x18xf32>, vector<8x18xf32> -> vector<24x18xf32>
    %cst_28 = arith.constant dense<0.000000e+00> : vector<16x18xf32>
    %44 = tpu.matmul %4, %43, %cst_28 {dimension_numbers = #tpu.dot_dimension_numbers<[1], [0], [0], [1], [0, 0, 1, 1], [], []>} : vector<16x24xf32>, vector<24x18xf32>, vector<16x18xf32> -> vector<16x18xf32>
    %45 = vector.broadcast %5 : vector<16x1xf32> to vector<16x18xf32>
    %46 = arith.addf %44, %45 : vector<16x18xf32>
    %47 = arith.addf %46, %20 : vector<16x18xf32>
    %cst_29 = arith.constant 0.000000e+00 : f32
    %48 = vector.broadcast %cst_29 : f32 to vector<16x18xf32>
    %49 = arith.maximumf %47, %48 : vector<16x18xf32>
    %50 = vector.extract_strided_slice %49 {offsets = [0, 1], sizes = [16, 16], strides = [1, 1]} : vector<16x18xf32> to vector<16x16xf32>
    %c0_30 = arith.constant 0 : index
    %c0_31 = arith.constant 0 : index
    %c0_32 = arith.constant 0 : index
    %51 = vector.load %arg10[%c0_30, %c0_31, %c0_32] : memref<2x16x16xf32, #tpu.memory_space<vmem>>, vector<1x16x16xf32>
    %52 = vector.shape_cast %51 : vector<1x16x16xf32> to vector<16x16xf32>
    %53 = vector.shape_cast %50 : vector<16x16xf32> to vector<1x16x16xf32>
    tpu.vector_store %arg10[%c0_30, %c0_31, %c0_32], %53 {strides = array<i32>} : memref<2x16x16xf32, #tpu.memory_space<vmem>>, vector<1x16x16xf32>,
    %c1 = arith.constant 1 : index
    %c0_33 = arith.constant 0 : index
    %c0_34 = arith.constant 0 : index
    %54 = vector.load %arg1[%c1, %c0_33, %c0_34] : memref<2x8x18xf32, #tpu.memory_space<vmem>>, vector<1x8x18xf32>
    %55 = vector.shape_cast %54 : vector<1x8x18xf32> to vector<8x18xf32>
    %cst_35 = arith.constant dense<0.000000e+00> : vector<16x18xf32>
    %56 = tpu.matmul %6, %55, %cst_35 {dimension_numbers = #tpu.dot_dimension_numbers<[1], [0], [0], [1], [0, 0, 1, 1], [], []>} : vector<16x8xf32>, vector<8x18xf32>, vector<16x18xf32> -> vector<16x18xf32>
    %57 = vector.broadcast %7 : vector<16x1xf32> to vector<16x18xf32>
    %58 = arith.addf %56, %57 : vector<16x18xf32>
    %c1_i32_36 = arith.constant 1 : i32
    %59 = tpu.dynamic_rotate %55 by %c1_i32_36 dim 1 : vector<8x18xf32>, i32 -> vector<8x18xf32>
    %c17_i32_37 = arith.constant 17 : i32
    %60 = tpu.dynamic_rotate %55 by %c17_i32_37 dim 1 : vector<8x18xf32>, i32 -> vector<8x18xf32>
    %61 = tpu.concatenate %59, %55, %60 in 0 : vector<8x18xf32>, vector<8x18xf32>, vector<8x18xf32> -> vector<24x18xf32>
    %cst_38 = arith.constant dense<0.000000e+00> : vector<8x18xf32>
    %62 = tpu.matmul %0, %61, %cst_38 {dimension_numbers = #tpu.dot_dimension_numbers<[1], [0], [0], [1], [0, 0, 1, 1], [], []>} : vector<8x24xf32>, vector<24x18xf32>, vector<8x18xf32> -> vector<8x18xf32>
    %63 = vector.broadcast %1 : vector<8x1xf32> to vector<8x18xf32>
    %64 = arith.addf %62, %63 : vector<8x18xf32>
    %cst_39 = arith.constant 0.000000e+00 : f32
    %65 = vector.broadcast %cst_39 : f32 to vector<8x18xf32>
    %66 = arith.maximumf %64, %65 : vector<8x18xf32>
    %67 = vector.broadcast %15 : vector<1x18xf32> to vector<8x18xf32>
    %68 = arith.mulf %66, %67 : vector<8x18xf32>
    %c1_i32_40 = arith.constant 1 : i32
    %69 = tpu.dynamic_rotate %68 by %c1_i32_40 dim 1 : vector<8x18xf32>, i32 -> vector<8x18xf32>
    %c17_i32_41 = arith.constant 17 : i32
    %70 = tpu.dynamic_rotate %68 by %c17_i32_41 dim 1 : vector<8x18xf32>, i32 -> vector<8x18xf32>
    %71 = tpu.concatenate %69, %68, %70 in 0 : vector<8x18xf32>, vector<8x18xf32>, vector<8x18xf32> -> vector<24x18xf32>
    %cst_42 = arith.constant dense<0.000000e+00> : vector<8x18xf32>
    %72 = tpu.matmul %2, %71, %cst_42 {dimension_numbers = #tpu.dot_dimension_numbers<[1], [0], [0], [1], [0, 0, 1, 1], [], []>} : vector<8x24xf32>, vector<24x18xf32>, vector<8x18xf32> -> vector<8x18xf32>
    %73 = vector.broadcast %3 : vector<8x1xf32> to vector<8x18xf32>
    %74 = arith.addf %72, %73 : vector<8x18xf32>
    %cst_43 = arith.constant 0.000000e+00 : f32
    %75 = vector.broadcast %cst_43 : f32 to vector<8x18xf32>
    %76 = arith.maximumf %74, %75 : vector<8x18xf32>
    %77 = vector.broadcast %15 : vector<1x18xf32> to vector<8x18xf32>
    %78 = arith.mulf %76, %77 : vector<8x18xf32>
    %c1_i32_44 = arith.constant 1 : i32
    %79 = tpu.dynamic_rotate %78 by %c1_i32_44 dim 1 : vector<8x18xf32>, i32 -> vector<8x18xf32>
    %c17_i32_45 = arith.constant 17 : i32
    %80 = tpu.dynamic_rotate %78 by %c17_i32_45 dim 1 : vector<8x18xf32>, i32 -> vector<8x18xf32>
    %81 = tpu.concatenate %79, %78, %80 in 0 : vector<8x18xf32>, vector<8x18xf32>, vector<8x18xf32> -> vector<24x18xf32>
    %cst_46 = arith.constant dense<0.000000e+00> : vector<16x18xf32>
    %82 = tpu.matmul %4, %81, %cst_46 {dimension_numbers = #tpu.dot_dimension_numbers<[1], [0], [0], [1], [0, 0, 1, 1], [], []>} : vector<16x24xf32>, vector<24x18xf32>, vector<16x18xf32> -> vector<16x18xf32>
    %83 = vector.broadcast %5 : vector<16x1xf32> to vector<16x18xf32>
    %84 = arith.addf %82, %83 : vector<16x18xf32>
    %85 = arith.addf %84, %58 : vector<16x18xf32>
    %cst_47 = arith.constant 0.000000e+00 : f32
    %86 = vector.broadcast %cst_47 : f32 to vector<16x18xf32>
    %87 = arith.maximumf %85, %86 : vector<16x18xf32>
    %88 = vector.extract_strided_slice %87 {offsets = [0, 1], sizes = [16, 16], strides = [1, 1]} : vector<16x18xf32> to vector<16x16xf32>
    %c1_48 = arith.constant 1 : index
    %c0_49 = arith.constant 0 : index
    %c0_50 = arith.constant 0 : index
    %89 = vector.load %arg10[%c1_48, %c0_49, %c0_50] : memref<2x16x16xf32, #tpu.memory_space<vmem>>, vector<1x16x16xf32>
    %90 = vector.shape_cast %89 : vector<1x16x16xf32> to vector<16x16xf32>
    %91 = vector.shape_cast %88 : vector<16x16xf32> to vector<1x16x16xf32>
    tpu.vector_store %arg10[%c1_48, %c0_49, %c0_50], %91 {strides = array<i32>} : memref<2x16x16xf32, #tpu.memory_space<vmem>>, vector<1x16x16xf32>,
    return
  }
  func.func @transform_0(%arg0: i32) -> (i32, i32, i32) {
    %c0_i32 = arith.constant 0 : i32
    %c0_i32_0 = arith.constant 0 : i32
    %c0_i32_1 = arith.constant 0 : i32
    return %arg0, %c0_i32, %c0_i32_0 : i32, i32, i32
  }
  func.func @transform_1(%arg0: i32) -> (i32, i32) {
    %c0_i32 = arith.constant 0 : i32
    %c0_i32_0 = arith.constant 0 : i32
    %c0_i32_1 = arith.constant 0 : i32
    return %c0_i32, %c0_i32_0 : i32, i32
  }
  func.func @transform_2(%arg0: i32) -> (i32, i32) {
    %c0_i32 = arith.constant 0 : i32
    %c0_i32_0 = arith.constant 0 : i32
    %c0_i32_1 = arith.constant 0 : i32
    return %c0_i32, %c0_i32_0 : i32, i32
  }
  func.func @transform_3(%arg0: i32) -> (i32, i32) {
    %c0_i32 = arith.constant 0 : i32
    %c0_i32_0 = arith.constant 0 : i32
    %c0_i32_1 = arith.constant 0 : i32
    return %c0_i32, %c0_i32_0 : i32, i32
  }
  func.func @transform_4(%arg0: i32) -> (i32, i32) {
    %c0_i32 = arith.constant 0 : i32
    %c0_i32_0 = arith.constant 0 : i32
    %c0_i32_1 = arith.constant 0 : i32
    return %c0_i32, %c0_i32_0 : i32, i32
  }
  func.func @transform_5(%arg0: i32) -> (i32, i32) {
    %c0_i32 = arith.constant 0 : i32
    %c0_i32_0 = arith.constant 0 : i32
    %c0_i32_1 = arith.constant 0 : i32
    return %c0_i32, %c0_i32_0 : i32, i32
  }
  func.func @transform_6(%arg0: i32) -> (i32, i32) {
    %c0_i32 = arith.constant 0 : i32
    %c0_i32_0 = arith.constant 0 : i32
    %c0_i32_1 = arith.constant 0 : i32
    return %c0_i32, %c0_i32_0 : i32, i32
  }
  func.func @transform_7(%arg0: i32) -> (i32, i32) {
    %c0_i32 = arith.constant 0 : i32
    %c0_i32_0 = arith.constant 0 : i32
    %c0_i32_1 = arith.constant 0 : i32
    return %c0_i32, %c0_i32_0 : i32, i32
  }
  func.func @transform_8(%arg0: i32) -> (i32, i32) {
    %c0_i32 = arith.constant 0 : i32
    %c0_i32_0 = arith.constant 0 : i32
    %c0_i32_1 = arith.constant 0 : i32
    return %c0_i32, %c0_i32_0 : i32, i32
  }
  func.func @transform_9(%arg0: i32) -> (i32, i32, i32) {
    %c0_i32 = arith.constant 0 : i32
    %c0_i32_0 = arith.constant 0 : i32
    %c0_i32_1 = arith.constant 0 : i32
    return %arg0, %c0_i32, %c0_i32_0 : i32, i32, i32
  }
}

</mosaic_0001>

<llo_original>
// kernel: tpu_custom_call.1
$region0: #{tpu_custom_call.1}
  #allocation0 [shape = 'u32[]', space=smem, size = 0x4, offset = 0x4, fixed_abs, tag = 'smem constant byte address 0x4 - core index']
  #allocation1 [shape = 'u32[144,128]{1,0:T(1,128)}', space=vmem, size = 0x12000, scoped, tag = 'internal scratch']
  %s0 = inlined_call_operand.vmem [shape: f32[2,8,18], index: 0, kind: input, shape index: {}]
  %s1 = inlined_call_operand.vmem [shape: f32[8,24], index: 1, kind: input, shape index: {}]
  %s2 = inlined_call_operand.vmem [shape: f32[8,1], index: 2, kind: input, shape index: {}]
  %s3 = inlined_call_operand.vmem [shape: f32[8,24], index: 3, kind: input, shape index: {}]
  %s4 = inlined_call_operand.vmem [shape: f32[8,1], index: 4, kind: input, shape index: {}]
  %s5 = inlined_call_operand.vmem [shape: f32[16,24], index: 5, kind: input, shape index: {}]
  %s6 = inlined_call_operand.vmem [shape: f32[16,1], index: 6, kind: input, shape index: {}]
  %s7 = inlined_call_operand.vmem [shape: f32[16,8], index: 7, kind: input, shape index: {}]
  %s8 = inlined_call_operand.vmem [shape: f32[16,1], index: 8, kind: input, shape index: {}]
  %s9 = inlined_call_operand.hbm [shape: f32[2,16,16], index: 9, kind: output, shape index: {}]
  %s10 = sld [smem:[#allocation0]]
  $region46: #{tpu_custom_call.1} parent=0
    _
  %s12 = ssub.s32 1, %s10
  %s13 = scalar_select 0, %s12, %s10
  $region1: #{tpu_custom_call.1} parent=0
    #allocation2 [shape = 'u8[16384]{0}', space=vmem, size = 0x4000, scoped, tag = 'output window, operand 0, single buffered']
    #allocation3 [shape = 's32[1]{0}', space=sflag, size = 0x4, scoped, tag = 'scoped memory for tpu_custom_call.1']
    %14 = vsyncpa [#allocation3], 0
    // Predicated region
    $region2: #{tpu_custom_call.1} parent=1 // pred_check
      _
    $region3: #{tpu_custom_call.1} parent=1 // pred_check_branch
      %16 = sbr.rel (0) target = $region5
    $region4: #{tpu_custom_call.1} parent=1 // pred_region
      _
    $region5: #{tpu_custom_call.1} parent=1 // pred_fallthru
      _
    // Predicated region
    $region6: #{tpu_custom_call.1} parent=1 // pred_check
      _
    $region7: #{tpu_custom_call.1} parent=1 // pred_check_branch
      %18 = sbr.rel (0) target = $region9
    $region8: #{tpu_custom_call.1} parent=1 // pred_region
      _
    $region9: #{tpu_custom_call.1} parent=1 // pred_fallthru
      _
    // Predicated region
    $region10: #{tpu_custom_call.1} parent=1 // pred_check
      _
    $region11: #{tpu_custom_call.1} parent=1 // pred_check_branch
      %20 = sbr.rel (0) target = $region13
    $region12: #{tpu_custom_call.1} parent=1 // pred_region
      _
    $region13: #{tpu_custom_call.1} parent=1 // pred_fallthru
      _
    // Predicated region
    $region14: #{tpu_custom_call.1} parent=1 // pred_check
      _
    $region15: #{tpu_custom_call.1} parent=1 // pred_check_branch
      %22 = sbr.rel (0) target = $region17
    $region16: #{tpu_custom_call.1} parent=1 // pred_region
      _
    $region17: #{tpu_custom_call.1} parent=1 // pred_fallthru
      _
    // Predicated region
    $region18: #{tpu_custom_call.1} parent=1 // pred_check
      _
    $region19: #{tpu_custom_call.1} parent=1 // pred_check_branch
      %24 = sbr.rel (0) target = $region21
    $region20: #{tpu_custom_call.1} parent=1 // pred_region
      _
    $region21: #{tpu_custom_call.1} parent=1 // pred_fallthru
      _
    // Predicated region
    $region22: #{tpu_custom_call.1} parent=1 // pred_check
      _
    $region23: #{tpu_custom_call.1} parent=1 // pred_check_branch
      %26 = sbr.rel (0) target = $region25
    $region24: #{tpu_custom_call.1} parent=1 // pred_region
      _
    $region25: #{tpu_custom_call.1} parent=1 // pred_fallthru
      _
    // Predicated region
    $region26: #{tpu_custom_call.1} parent=1 // pred_check
      _
    $region27: #{tpu_custom_call.1} parent=1 // pred_check_branch
      %28 = sbr.rel (0) target = $region29
    $region28: #{tpu_custom_call.1} parent=1 // pred_region
      _
    $region29: #{tpu_custom_call.1} parent=1 // pred_fallthru
      _
    // Predicated region
    $region30: #{tpu_custom_call.1} parent=1 // pred_check
      _
    $region31: #{tpu_custom_call.1} parent=1 // pred_check_branch
      %30 = sbr.rel (0) target = $region33
    $region32: #{tpu_custom_call.1} parent=1 // pred_region
      _
    $region33: #{tpu_custom_call.1} parent=1 // pred_fallthru
      _
    // Predicated region
    $region34: #{tpu_custom_call.1} parent=1 // pred_check
      _
    $region35: #{tpu_custom_call.1} parent=1 // pred_check_branch
      %32 = sbr.rel (0) target = $region37
    $region36: #{tpu_custom_call.1} parent=1 // pred_region
      _
    $region37: #{tpu_custom_call.1} parent=1 // pred_fallthru
      _
    %v33 = vld [vmem:[%s1] sm:$0xff]
    %v34 = vld [vmem:[%s2] sm:$0xff]
    %v35 = vld [vmem:[%s3] sm:$0xff]
    %v36 = vld [vmem:[%s4] sm:$0xff]
    %v37 = vld [vmem:[%s5] sm:$0xff]
    %v38 = vld [vmem:[%s5 + $0x8] sm:$0xff]
    %v39 = vld [vmem:[%s6] sm:$0xff]
    %v40 = vld [vmem:[%s6 + $0x8] sm:$0xff]
    %v41 = vld [vmem:[%s7] sm:$0xff]
    %v42 = vld [vmem:[%s7 + $0x8] sm:$0xff]
    %v43 = vld [vmem:[%s8] sm:$0xff]
    %v44 = vld [vmem:[%s8 + $0x8] sm:$0xff]
    %v45 = vlaneseq
    %v46 = vand.u32 %v45, 127
    %vm47 = vcmp.ge.s32.totalorder %v46, 1
    %vm48 = vcmp.lt.s32.totalorder %v46, 17
    %vm49 = vmand %vm47, %vm48
    %v50 = vsel %vm49, 1, 0
    %v51 = vcvt.s32.f32 %v50
    %v52 = vld [vmem:[%s0] sm:$0xff]
    %54 = vset.pattern.permute.xlu0 0
    %55 = vperm.xlu0 %54, %v43
    %v56 = vpop.permute.xlu0 %55
    %59 = vset.pattern.permute.xlu0 0
    %60 = vperm.xlu0 %59, %v44
    %v61 = vpop.permute.xlu0 %60
    %vm63 = vcmask 64512
    %v65 = vsel %vm63, %v41, 0
    %v68 = vsel %vm63, %v42, 0
    %70 = vmatprep.subr.mxu0 0.0
    %71 = vmatpush1.msra.mxu0 0.0
    %72 = vmatprep.subr.mxu0 0.0
    %73 = vmatpush1.msra.mxu0 0.0
    %74 = vmatprep.subr.mxu0 0.0
    %75 = vmatpush1.msra.mxu0 0.0
    %76 = vmatprep.subr.mxu0 0.0
    %77 = vmatpush1.msra.mxu0 0.0
    %78 = vmatprep.subr.mxu0 0.0
    %79 = vmatpush1.msra.mxu0 0.0
    %80 = vmatprep.subr.mxu0 0.0
    %81 = vmatpush1.msra.mxu0 0.0
    %82 = vmatprep.subr.mxu0 0.0
    %83 = vmatpush1.msra.mxu0 0.0
    %84 = vmatprep.subr.mxu0 0.0
    %85 = vmatpush1.msra.mxu0 0.0
    %86 = vmatprep.subr.mxu0 0.0
    %87 = vmatpush1.msra.mxu0 0.0
    %88 = vmatprep.subr.mxu0 0.0
    %89 = vmatpush1.msra.mxu0 0.0
    %90 = vmatprep.subr.mxu0 0.0
    %91 = vmatpush1.msra.mxu0 0.0
    %92 = vmatprep.subr.mxu0 0.0
    %93 = vmatpush1.msra.mxu0 0.0
    %94 = vmatprep.subr.mxu0 0.0
    %95 = vmatpush1.msra.mxu0 0.0
    %96 = vmatprep.subr.mxu0 0.0
    %97 = vmatpush1.msra.mxu0 0.0
    %98 = vmatprep.subr.mxu0 0.0
    %99 = vmatpush1.msra.mxu0 0.0
    %100 = vmatprep.subr.mxu0 0.0
    %101 = vmatpush1.msra.mxu0 %v52
    %102 = vmatprep.subr.mxu0 0.0
    %103 = vmatpush2.msra.mxu0 0.0
    %104 = vmatprep.subr.mxu0 0.0
    %105 = vmatpush2.msra.mxu0 0.0
    %106 = vmatprep.subr.mxu0 0.0
    %107 = vmatpush2.msra.mxu0 0.0
    %108 = vmatprep.subr.mxu0 0.0
    %109 = vmatpush2.msra.mxu0 0.0
    %110 = vmatprep.subr.mxu0 0.0
    %111 = vmatpush2.msra.mxu0 0.0
    %112 = vmatprep.subr.mxu0 0.0
    %113 = vmatpush2.msra.mxu0 0.0
    %114 = vmatprep.subr.mxu0 0.0
    %115 = vmatpush2.msra.mxu0 0.0
    %116 = vmatprep.subr.mxu0 0.0
    %117 = vmatpush2.msra.mxu0 0.0
    %118 = vmatprep.subr.mxu0 0.0
    %119 = vmatpush2.msra.mxu0 0.0
    %120 = vmatprep.subr.mxu0 0.0
    %121 = vmatpush2.msra.mxu0 0.0
    %122 = vmatprep.subr.mxu0 0.0
    %123 = vmatpush2.msra.mxu0 0.0
    %124 = vmatprep.subr.mxu0 0.0
    %125 = vmatpush2.msra.mxu0 0.0
    %126 = vmatprep.subr.mxu0 0.0
    %127 = vmatpush2.msra.mxu0 0.0
    %128 = vmatprep.subr.mxu0 0.0
    %129 = vmatpush2.msra.mxu0 0.0
    %130 = vmatprep.subr.mxu0 0.0
    %131 = vmatpush2.msra.mxu0 0.0
    %132 = vmatprep.subr.mxu0 0.0
    %133 = vmatpush2.msra.mxu0 0.0
    %134 = vmatprep.mubr.f32.mxu0 0.0
    %135 = vmatmul.mubr.f32.gmra.mxu0 %v65
    %v136 = vpop.f32.mrf.mxu0
    %v137 = vadd.f32 %v56, %v136
    %v138 = vpop.f32.mrf.mxu0
    %139 = vmatprep.mubr.f32.mxu0 0.0
    %140 = vmatmul.mubr.f32.gmra.mxu0 %v68
    %v141 = vpop.f32.mrf.mxu0
    %v142 = vadd.f32 %v61, %v141
    %v143 = vpop.f32.mrf.mxu0
    %144 = vdwg.mxu0
    %vm145 = vcmask 1047696
    %146 = vrot.lane.b32.xlu0 %v52, 18
    %v147 = vpop.permute.xlu0 %146
    %v148 = vsel %vm145, %v147, %v52
    %149 = vrot.lane.b32.xlu0 %v148, 18
    %v150 = vpop.permute.xlu0 %149
    %v151 = vsel %vm145, %v150, %v52
    %153 = vrot.lane.b32.xlu0 %v52, 17
    %v154 = vpop.permute.xlu0 %153
    %156 = vrot.lane.b32.xlu0 %v151, 16
    %v157 = vpop.permute.xlu0 %156
    %159 = vset.pattern.permute.xlu0 0
    %160 = vperm.xlu0 %159, %v34
    %v161 = vpop.permute.xlu0 %160
    %163 = vrot.lane.b32.xlu0 %v151, 111
    %v164 = vpop.permute.xlu0 %163
    %165 = vrot.lane.b32.xlu0 %v154, 111
    %v166 = vpop.permute.xlu0 %165
    %167 = vrot.lane.b32.xlu0 %v157, 111
    %v168 = vpop.permute.xlu0 %167
    %vm172 = vcmask 195584
    %v174 = vsel %vm172, %v33, 0
    %176 = vmatprep.subr.mxu0 0.0
    %177 = vmatpush1.msra.mxu0 0.0
    %178 = vmatprep.subr.mxu0 0.0
    %179 = vmatpush1.msra.mxu0 0.0
    %180 = vmatprep.subr.mxu0 0.0
    %181 = vmatpush1.msra.mxu0 0.0
    %182 = vmatprep.subr.mxu0 0.0
    %183 = vmatpush1.msra.mxu0 0.0
    %184 = vmatprep.subr.mxu0 0.0
    %185 = vmatpush1.msra.mxu0 0.0
    %186 = vmatprep.subr.mxu0 0.0
    %187 = vmatpush1.msra.mxu0 0.0
    %188 = vmatprep.subr.mxu0 0.0
    %189 = vmatpush1.msra.mxu0 0.0
    %190 = vmatprep.subr.mxu0 0.0
    %191 = vmatpush1.msra.mxu0 0.0
    %192 = vmatprep.subr.mxu0 0.0
    %193 = vmatpush1.msra.mxu0 0.0
    %194 = vmatprep.subr.mxu0 0.0
    %195 = vmatpush1.msra.mxu0 0.0
    %196 = vmatprep.subr.mxu0 0.0
    %197 = vmatpush1.msra.mxu0 0.0
    %198 = vmatprep.subr.mxu0 0.0
    %199 = vmatpush1.msra.mxu0 0.0
    %200 = vmatprep.subr.mxu0 0.0
    %201 = vmatpush1.msra.mxu0 0.0
    %202 = vmatprep.subr.mxu0 0.0
    %203 = vmatpush1.msra.mxu0 %v168
    %204 = vmatprep.subr.mxu0 0.0
    %205 = vmatpush1.msra.mxu0 %v166
    %206 = vmatprep.subr.mxu0 0.0
    %207 = vmatpush1.msra.mxu0 %v164
    %208 = vmatprep.subr.mxu0 0.0
    %209 = vmatpush2.msra.mxu0 0.0
    %210 = vmatprep.subr.mxu0 0.0
    %211 = vmatpush2.msra.mxu0 0.0
    %212 = vmatprep.subr.mxu0 0.0
    %213 = vmatpush2.msra.mxu0 0.0
    %214 = vmatprep.subr.mxu0 0.0
    %215 = vmatpush2.msra.mxu0 0.0
    %216 = vmatprep.subr.mxu0 0.0
    %217 = vmatpush2.msra.mxu0 0.0
    %218 = vmatprep.subr.mxu0 0.0
    %219 = vmatpush2.msra.mxu0 0.0
    %220 = vmatprep.subr.mxu0 0.0
    %221 = vmatpush2.msra.mxu0 0.0
    %222 = vmatprep.subr.mxu0 0.0
    %223 = vmatpush2.msra.mxu0 0.0
    %224 = vmatprep.subr.mxu0 0.0
    %225 = vmatpush2.msra.mxu0 0.0
    %226 = vmatprep.subr.mxu0 0.0
    %227 = vmatpush2.msra.mxu0 0.0
    %228 = vmatprep.subr.mxu0 0.0
    %229 = vmatpush2.msra.mxu0 0.0
    %230 = vmatprep.subr.mxu0 0.0
    %231 = vmatpush2.msra.mxu0 0.0
    %232 = vmatprep.subr.mxu0 0.0
    %233 = vmatpush2.msra.mxu0 0.0
    %234 = vmatprep.subr.mxu0 0.0
    %235 = vmatpush2.msra.mxu0 0.0
    %236 = vmatprep.subr.mxu0 0.0
    %237 = vmatpush2.msra.mxu0 0.0
    %238 = vmatprep.subr.mxu0 0.0
    %239 = vmatpush2.msra.mxu0 0.0
    %240 = vmatprep.mubr.f32.mxu0 0.0
    %241 = vmatmul.mubr.f32.gmra.mxu0 %v174
    %v242 = vpop.f32.mrf.mxu0
    %v243 = vadd.f32 %v161, %v242
    %v244 = vpop.f32.mrf.mxu0
    %245 = vdwg.mxu0
    %v246 = vmax.f32 %v243, 0.0
    %v247 = vmul.f32 %v246, %v51
    %248 = vrot.lane.b32.xlu0 %v247, 18
    %v249 = vpop.permute.xlu0 %248
    %v250 = vsel %vm145, %v249, %v247
    %251 = vrot.lane.b32.xlu0 %v250, 18
    %v252 = vpop.permute.xlu0 %251
    %v253 = vsel %vm145, %v252, %v247
    %255 = vrot.lane.b32.xlu0 %v247, 17
    %v256 = vpop.permute.xlu0 %255
    %258 = vrot.lane.b32.xlu0 %v253, 16
    %v259 = vpop.permute.xlu0 %258
    %261 = vset.pattern.permute.xlu0 0
    %262 = vperm.xlu0 %261, %v36
    %v263 = vpop.permute.xlu0 %262
    %265 = vrot.lane.b32.xlu0 %v253, 111
    %v266 = vpop.permute.xlu0 %265
    %267 = vrot.lane.b32.xlu0 %v256, 111
    %v268 = vpop.permute.xlu0 %267
    %269 = vrot.lane.b32.xlu0 %v259, 111
    %v270 = vpop.permute.xlu0 %269
    %v275 = vsel %vm172, %v35, 0
    %277 = vmatprep.subr.mxu0 0.0
    %278 = vmatpush1.msra.mxu0 0.0
    %279 = vmatprep.subr.mxu0 0.0
    %280 = vmatpush1.msra.mxu0 0.0
    %281 = vmatprep.subr.mxu0 0.0
    %282 = vmatpush1.msra.mxu0 0.0
    %283 = vmatprep.subr.mxu0 0.0
    %284 = vmatpush1.msra.mxu0 0.0
    %285 = vmatprep.subr.mxu0 0.0
    %286 = vmatpush1.msra.mxu0 0.0
    %287 = vmatprep.subr.mxu0 0.0
    %288 = vmatpush1.msra.mxu0 0.0
    %289 = vmatprep.subr.mxu0 0.0
    %290 = vmatpush1.msra.mxu0 0.0
    %291 = vmatprep.subr.mxu0 0.0
    %292 = vmatpush1.msra.mxu0 0.0
    %293 = vmatprep.subr.mxu0 0.0
    %294 = vmatpush1.msra.mxu0 0.0
    %295 = vmatprep.subr.mxu0 0.0
    %296 = vmatpush1.msra.mxu0 0.0
    %297 = vmatprep.subr.mxu0 0.0
    %298 = vmatpush1.msra.mxu0 0.0
    %299 = vmatprep.subr.mxu0 0.0
    %300 = vmatpush1.msra.mxu0 0.0
    %301 = vmatprep.subr.mxu0 0.0
    %302 = vmatpush1.msra.mxu0 0.0
    %303 = vmatprep.subr.mxu0 0.0
    %304 = vmatpush1.msra.mxu0 %v270
    %305 = vmatprep.subr.mxu0 0.0
    %306 = vmatpush1.msra.mxu0 %v268
    %307 = vmatprep.subr.mxu0 0.0
    %308 = vmatpush1.msra.mxu0 %v266
    %309 = vmatprep.subr.mxu0 0.0
    %310 = vmatpush2.msra.mxu0 0.0
    %311 = vmatprep.subr.mxu0 0.0
    %312 = vmatpush2.msra.mxu0 0.0
    %313 = vmatprep.subr.mxu0 0.0
    %314 = vmatpush2.msra.mxu0 0.0
    %315 = vmatprep.subr.mxu0 0.0
    %316 = vmatpush2.msra.mxu0 0.0
    %317 = vmatprep.subr.mxu0 0.0
    %318 = vmatpush2.msra.mxu0 0.0
    %319 = vmatprep.subr.mxu0 0.0
    %320 = vmatpush2.msra.mxu0 0.0
    %321 = vmatprep.subr.mxu0 0.0
    %322 = vmatpush2.msra.mxu0 0.0
    %323 = vmatprep.subr.mxu0 0.0
    %324 = vmatpush2.msra.mxu0 0.0
    %325 = vmatprep.subr.mxu0 0.0
    %326 = vmatpush2.msra.mxu0 0.0
    %327 = vmatprep.subr.mxu0 0.0
    %328 = vmatpush2.msra.mxu0 0.0
    %329 = vmatprep.subr.mxu0 0.0
    %330 = vmatpush2.msra.mxu0 0.0
    %331 = vmatprep.subr.mxu0 0.0
    %332 = vmatpush2.msra.mxu0 0.0
    %333 = vmatprep.subr.mxu0 0.0
    %334 = vmatpush2.msra.mxu0 0.0
    %335 = vmatprep.subr.mxu0 0.0
    %336 = vmatpush2.msra.mxu0 0.0
    %337 = vmatprep.subr.mxu0 0.0
    %338 = vmatpush2.msra.mxu0 0.0
    %339 = vmatprep.subr.mxu0 0.0
    %340 = vmatpush2.msra.mxu0 0.0
    %341 = vmatprep.mubr.f32.mxu0 0.0
    %342 = vmatmul.mubr.f32.gmra.mxu0 %v275
    %v343 = vpop.f32.mrf.mxu0
    %v344 = vadd.f32 %v263, %v343
    %v345 = vpop.f32.mrf.mxu0
    %346 = vdwg.mxu0
    %v347 = vmax.f32 %v344, 0.0
    %v348 = vmul.f32 %v347, %v51
    %349 = vrot.lane.b32.xlu0 %v348, 18
    %v350 = vpop.permute.xlu0 %349
    %v351 = vsel %vm145, %v350, %v348
    %352 = vrot.lane.b32.xlu0 %v351, 18
    %v353 = vpop.permute.xlu0 %352
    %v354 = vsel %vm145, %v353, %v348
    %356 = vrot.lane.b32.xlu0 %v348, 17
    %v357 = vpop.permute.xlu0 %356
    %359 = vrot.lane.b32.xlu0 %v354, 16
    %v360 = vpop.permute.xlu0 %359
    %362 = vset.pattern.permute.xlu0 0
    %363 = vperm.xlu0 %362, %v39
    %v364 = vpop.permute.xlu0 %363
    %367 = vset.pattern.permute.xlu0 0
    %368 = vperm.xlu0 %367, %v40
    %v369 = vpop.permute.xlu0 %368
    %371 = vrot.lane.b32.xlu0 %v354, 111
    %v372 = vpop.permute.xlu0 %371
    %373 = vrot.lane.b32.xlu0 %v357, 111
    %v374 = vpop.permute.xlu0 %373
    %375 = vrot.lane.b32.xlu0 %v360, 111
    %v376 = vpop.permute.xlu0 %375
    %v381 = vsel %vm172, %v37, 0
    %v384 = vsel %vm172, %v38, 0
    %386 = vmatprep.subr.mxu0 0.0
    %387 = vmatpush1.msra.mxu0 0.0
    %388 = vmatprep.subr.mxu0 0.0
    %389 = vmatpush1.msra.mxu0 0.0
    %390 = vmatprep.subr.mxu0 0.0
    %391 = vmatpush1.msra.mxu0 0.0
    %392 = vmatprep.subr.mxu0 0.0
    %393 = vmatpush1.msra.mxu0 0.0
    %394 = vmatprep.subr.mxu0 0.0
    %395 = vmatpush1.msra.mxu0 0.0
    %396 = vmatprep.subr.mxu0 0.0
    %397 = vmatpush1.msra.mxu0 0.0
    %398 = vmatprep.subr.mxu0 0.0
    %399 = vmatpush1.msra.mxu0 0.0
    %400 = vmatprep.subr.mxu0 0.0
    %401 = vmatpush1.msra.mxu0 0.0
    %402 = vmatprep.subr.mxu0 0.0
    %403 = vmatpush1.msra.mxu0 0.0
    %404 = vmatprep.subr.mxu0 0.0
    %405 = vmatpush1.msra.mxu0 0.0
    %406 = vmatprep.subr.mxu0 0.0
    %407 = vmatpush1.msra.mxu0 0.0
    %408 = vmatprep.subr.mxu0 0.0
    %409 = vmatpush1.msra.mxu0 0.0
    %410 = vmatprep.subr.mxu0 0.0
    %411 = vmatpush1.msra.mxu0 0.0
    %412 = vmatprep.subr.mxu0 0.0
    %413 = vmatpush1.msra.mxu0 %v376
    %414 = vmatprep.subr.mxu0 0.0
    %415 = vmatpush1.msra.mxu0 %v374
    %416 = vmatprep.subr.mxu0 0.0
    %417 = vmatpush1.msra.mxu0 %v372
    %418 = vmatprep.subr.mxu0 0.0
    %419 = vmatpush2.msra.mxu0 0.0
    %420 = vmatprep.subr.mxu0 0.0
    %421 = vmatpush2.msra.mxu0 0.0
    %422 = vmatprep.subr.mxu0 0.0
    %423 = vmatpush2.msra.mxu0 0.0
    %424 = vmatprep.subr.mxu0 0.0
    %425 = vmatpush2.msra.mxu0 0.0
    %426 = vmatprep.subr.mxu0 0.0
    %427 = vmatpush2.msra.mxu0 0.0
    %428 = vmatprep.subr.mxu0 0.0
    %429 = vmatpush2.msra.mxu0 0.0
    %430 = vmatprep.subr.mxu0 0.0
    %431 = vmatpush2.msra.mxu0 0.0
    %432 = vmatprep.subr.mxu0 0.0
    %433 = vmatpush2.msra.mxu0 0.0
    %434 = vmatprep.subr.mxu0 0.0
    %435 = vmatpush2.msra.mxu0 0.0
    %436 = vmatprep.subr.mxu0 0.0
    %437 = vmatpush2.msra.mxu0 0.0
    %438 = vmatprep.subr.mxu0 0.0
    %439 = vmatpush2.msra.mxu0 0.0
    %440 = vmatprep.subr.mxu0 0.0
    %441 = vmatpush2.msra.mxu0 0.0
    %442 = vmatprep.subr.mxu0 0.0
    %443 = vmatpush2.msra.mxu0 0.0
    %444 = vmatprep.subr.mxu0 0.0
    %445 = vmatpush2.msra.mxu0 0.0
    %446 = vmatprep.subr.mxu0 0.0
    %447 = vmatpush2.msra.mxu0 0.0
    %448 = vmatprep.subr.mxu0 0.0
    %449 = vmatpush2.msra.mxu0 0.0
    %450 = vmatprep.mubr.f32.mxu0 0.0
    %451 = vmatmul.mubr.f32.gmra.mxu0 %v381
    %v452 = vpop.f32.mrf.mxu0
    %v453 = vadd.f32 %v364, %v452
    %v454 = vpop.f32.mrf.mxu0
    %455 = vmatprep.mubr.f32.mxu0 0.0
    %456 = vmatmul.mubr.f32.gmra.mxu0 %v384
    %v457 = vpop.f32.mrf.mxu0
    %v458 = vadd.f32 %v369, %v457
    %v459 = vpop.f32.mrf.mxu0
    %460 = vdwg.mxu0
    %v461 = vadd.f32 %v453, %v137
    %v462 = vadd.f32 %v458, %v142
    %v463 = vmax.f32 %v461, 0.0
    %v464 = vmax.f32 %v462, 0.0
    %467 = vrot.lane.b32.xlu0 %v463, 127
    %v468 = vpop.permute.xlu0 %467
    %469 = vrot.lane.b32.xlu0 %v464, 127
    %v470 = vpop.permute.xlu0 %469
    %vm473 = vcmask 130048
    %474 = vst.msk [vmem:[#allocation2] sm:$0xff] %vm473, %v468
    %475 = vst.msk [vmem:[#allocation2 + $0x8] sm:$0xff] %vm473, %v470
    %s476 = scalar_lea.vmem %s0, 8
    %v477 = vld [vmem:[%s476] sm:$0xff]
    %478 = vmatprep.subr.mxu0 0.0
    %479 = vmatpush1.msra.mxu0 0.0
    %480 = vmatprep.subr.mxu0 0.0
    %481 = vmatpush1.msra.mxu0 0.0
    %482 = vmatprep.subr.mxu0 0.0
    %483 = vmatpush1.msra.mxu0 0.0
    %484 = vmatprep.subr.mxu0 0.0
    %485 = vmatpush1.msra.mxu0 0.0
    %486 = vmatprep.subr.mxu0 0.0
    %487 = vmatpush1.msra.mxu0 0.0
    %488 = vmatprep.subr.mxu0 0.0
    %489 = vmatpush1.msra.mxu0 0.0
    %490 = vmatprep.subr.mxu0 0.0
    %491 = vmatpush1.msra.mxu0 0.0
    %492 = vmatprep.subr.mxu0 0.0
    %493 = vmatpush1.msra.mxu0 0.0
    %494 = vmatprep.subr.mxu0 0.0
    %495 = vmatpush1.msra.mxu0 0.0
    %496 = vmatprep.subr.mxu0 0.0
    %497 = vmatpush1.msra.mxu0 0.0
    %498 = vmatprep.subr.mxu0 0.0
    %499 = vmatpush1.msra.mxu0 0.0
    %500 = vmatprep.subr.mxu0 0.0
    %501 = vmatpush1.msra.mxu0 0.0
    %502 = vmatprep.subr.mxu0 0.0
    %503 = vmatpush1.msra.mxu0 0.0
    %504 = vmatprep.subr.mxu0 0.0
    %505 = vmatpush1.msra.mxu0 0.0
    %506 = vmatprep.subr.mxu0 0.0
    %507 = vmatpush1.msra.mxu0 0.0
    %508 = vmatprep.subr.mxu0 0.0
    %509 = vmatpush1.msra.mxu0 %v477
    %510 = vmatprep.subr.mxu0 0.0
    %511 = vmatpush2.msra.mxu0 0.0
    %512 = vmatprep.subr.mxu0 0.0
    %513 = vmatpush2.msra.mxu0 0.0
    %514 = vmatprep.subr.mxu0 0.0
    %515 = vmatpush2.msra.mxu0 0.0
    %516 = vmatprep.subr.mxu0 0.0
    %517 = vmatpush2.msra.mxu0 0.0
    %518 = vmatprep.subr.mxu0 0.0
    %519 = vmatpush2.msra.mxu0 0.0
    %520 = vmatprep.subr.mxu0 0.0
    %521 = vmatpush2.msra.mxu0 0.0
    %522 = vmatprep.subr.mxu0 0.0
    %523 = vmatpush2.msra.mxu0 0.0
    %524 = vmatprep.subr.mxu0 0.0
    %525 = vmatpush2.msra.mxu0 0.0
    %526 = vmatprep.subr.mxu0 0.0
    %527 = vmatpush2.msra.mxu0 0.0
    %528 = vmatprep.subr.mxu0 0.0
    %529 = vmatpush2.msra.mxu0 0.0
    %530 = vmatprep.subr.mxu0 0.0
    %531 = vmatpush2.msra.mxu0 0.0
    %532 = vmatprep.subr.mxu0 0.0
    %533 = vmatpush2.msra.mxu0 0.0
    %534 = vmatprep.subr.mxu0 0.0
    %535 = vmatpush2.msra.mxu0 0.0
    %536 = vmatprep.subr.mxu0 0.0
    %537 = vmatpush2.msra.mxu0 0.0
    %538 = vmatprep.subr.mxu0 0.0
    %539 = vmatpush2.msra.mxu0 0.0
    %540 = vmatprep.subr.mxu0 0.0
    %541 = vmatpush2.msra.mxu0 0.0
    %542 = vmatprep.mubr.f32.mxu0 0.0
    %543 = vmatmul.mubr.f32.gmra.mxu0 %v65
    %v544 = vpop.f32.mrf.mxu0
    %v545 = vadd.f32 %v56, %v544
    %v546 = vpop.f32.mrf.mxu0
    %547 = vmatprep.mubr.f32.mxu0 0.0
    %548 = vmatmul.mubr.f32.gmra.mxu0 %v68
    %v549 = vpop.f32.mrf.mxu0
    %v550 = vadd.f32 %v61, %v549
    %v551 = vpop.f32.mrf.mxu0
    %552 = vdwg.mxu0
    %553 = vrot.lane.b32.xlu0 %v477, 18
    %v554 = vpop.permute.xlu0 %553
    %v555 = vsel %vm145, %v554, %v477
    %556 = vrot.lane.b32.xlu0 %v555, 18
    %v557 = vpop.permute.xlu0 %556
    %v558 = vsel %vm145, %v557, %v477
    %560 = vrot.lane.b32.xlu0 %v477, 17
    %v561 = vpop.permute.xlu0 %560
    %563 = vrot.lane.b32.xlu0 %v558, 16
    %v564 = vpop.permute.xlu0 %563
    %565 = vrot.lane.b32.xlu0 %v558, 111
    %v566 = vpop.permute.xlu0 %565
    %567 = vrot.lane.b32.xlu0 %v561, 111
    %v568 = vpop.permute.xlu0 %567
    %569 = vrot.lane.b32.xlu0 %v564, 111
    %v570 = vpop.permute.xlu0 %569
    %574 = vmatprep.subr.mxu0 0.0
    %575 = vmatpush1.msra.mxu0 0.0
    %576 = vmatprep.subr.mxu0 0.0
    %577 = vmatpush1.msra.mxu0 0.0
    %578 = vmatprep.subr.mxu0 0.0
    %579 = vmatpush1.msra.mxu0 0.0
    %580 = vmatprep.subr.mxu0 0.0
    %581 = vmatpush1.msra.mxu0 0.0
    %582 = vmatprep.subr.mxu0 0.0
    %583 = vmatpush1.msra.mxu0 0.0
    %584 = vmatprep.subr.mxu0 0.0
    %585 = vmatpush1.msra.mxu0 0.0
    %586 = vmatprep.subr.mxu0 0.0
    %587 = vmatpush1.msra.mxu0 0.0
    %588 = vmatprep.subr.mxu0 0.0
    %589 = vmatpush1.msra.mxu0 0.0
    %590 = vmatprep.subr.mxu0 0.0
    %591 = vmatpush1.msra.mxu0 0.0
    %592 = vmatprep.subr.mxu0 0.0
    %593 = vmatpush1.msra.mxu0 0.0
    %594 = vmatprep.subr.mxu0 0.0
    %595 = vmatpush1.msra.mxu0 0.0
    %596 = vmatprep.subr.mxu0 0.0
    %597 = vmatpush1.msra.mxu0 0.0
    %598 = vmatprep.subr.mxu0 0.0
    %599 = vmatpush1.msra.mxu0 0.0
    %600 = vmatprep.subr.mxu0 0.0
    %601 = vmatpush1.msra.mxu0 %v570
    %602 = vmatprep.subr.mxu0 0.0
    %603 = vmatpush1.msra.mxu0 %v568
    %604 = vmatprep.subr.mxu0 0.0
    %605 = vmatpush1.msra.mxu0 %v566
    %606 = vmatprep.subr.mxu0 0.0
    %607 = vmatpush2.msra.mxu0 0.0
    %608 = vmatprep.subr.mxu0 0.0
    %609 = vmatpush2.msra.mxu0 0.0
    %610 = vmatprep.subr.mxu0 0.0
    %611 = vmatpush2.msra.mxu0 0.0
    %612 = vmatprep.subr.mxu0 0.0
    %613 = vmatpush2.msra.mxu0 0.0
    %614 = vmatprep.subr.mxu0 0.0
    %615 = vmatpush2.msra.mxu0 0.0
    %616 = vmatprep.subr.mxu0 0.0
    %617 = vmatpush2.msra.mxu0 0.0
    %618 = vmatprep.subr.mxu0 0.0
    %619 = vmatpush2.msra.mxu0 0.0
    %620 = vmatprep.subr.mxu0 0.0
    %621 = vmatpush2.msra.mxu0 0.0
    %622 = vmatprep.subr.mxu0 0.0
    %623 = vmatpush2.msra.mxu0 0.0
    %624 = vmatprep.subr.mxu0 0.0
    %625 = vmatpush2.msra.mxu0 0.0
    %626 = vmatprep.subr.mxu0 0.0
    %627 = vmatpush2.msra.mxu0 0.0
    %628 = vmatprep.subr.mxu0 0.0
    %629 = vmatpush2.msra.mxu0 0.0
    %630 = vmatprep.subr.mxu0 0.0
    %631 = vmatpush2.msra.mxu0 0.0
    %632 = vmatprep.subr.mxu0 0.0
    %633 = vmatpush2.msra.mxu0 0.0
    %634 = vmatprep.subr.mxu0 0.0
    %635 = vmatpush2.msra.mxu0 0.0
    %636 = vmatprep.subr.mxu0 0.0
    %637 = vmatpush2.msra.mxu0 0.0
    %638 = vmatprep.mubr.f32.mxu0 0.0
    %639 = vmatmul.mubr.f32.gmra.mxu0 %v174
    %v640 = vpop.f32.mrf.mxu0
    %v641 = vadd.f32 %v161, %v640
    %v642 = vpop.f32.mrf.mxu0
    %643 = vdwg.mxu0
    %v644 = vmax.f32 %v641, 0.0
    %v645 = vmul.f32 %v644, %v51
    %646 = vrot.lane.b32.xlu0 %v645, 18
    %v647 = vpop.permute.xlu0 %646
    %v648 = vsel %vm145, %v647, %v645
    %649 = vrot.lane.b32.xlu0 %v648, 18
    %v650 = vpop.permute.xlu0 %649
    %v651 = vsel %vm145, %v650, %v645
    %653 = vrot.lane.b32.xlu0 %v645, 17
    %v654 = vpop.permute.xlu0 %653
    %656 = vrot.lane.b32.xlu0 %v651, 16
    %v657 = vpop.permute.xlu0 %656
    %658 = vrot.lane.b32.xlu0 %v651, 111
    %v659 = vpop.permute.xlu0 %658
    %660 = vrot.lane.b32.xlu0 %v654, 111
    %v661 = vpop.permute.xlu0 %660
    %662 = vrot.lane.b32.xlu0 %v657, 111
    %v663 = vpop.permute.xlu0 %662
    %667 = vmatprep.subr.mxu0 0.0
    %668 = vmatpush1.msra.mxu0 0.0
    %669 = vmatprep.subr.mxu0 0.0
    %670 = vmatpush1.msra.mxu0 0.0
    %671 = vmatprep.subr.mxu0 0.0
    %672 = vmatpush1.msra.mxu0 0.0
    %673 = vmatprep.subr.mxu0 0.0
    %674 = vmatpush1.msra.mxu0 0.0
    %675 = vmatprep.subr.mxu0 0.0
    %676 = vmatpush1.msra.mxu0 0.0
    %677 = vmatprep.subr.mxu0 0.0
    %678 = vmatpush1.msra.mxu0 0.0
    %679 = vmatprep.subr.mxu0 0.0
    %680 = vmatpush1.msra.mxu0 0.0
    %681 = vmatprep.subr.mxu0 0.0
    %682 = vmatpush1.msra.mxu0 0.0
    %683 = vmatprep.subr.mxu0 0.0
    %684 = vmatpush1.msra.mxu0 0.0
    %685 = vmatprep.subr.mxu0 0.0
    %686 = vmatpush1.msra.mxu0 0.0
    %687 = vmatprep.subr.mxu0 0.0
    %688 = vmatpush1.msra.mxu0 0.0
    %689 = vmatprep.subr.mxu0 0.0
    %690 = vmatpush1.msra.mxu0 0.0
    %691 = vmatprep.subr.mxu0 0.0
    %692 = vmatpush1.msra.mxu0 0.0
    %693 = vmatprep.subr.mxu0 0.0
    %694 = vmatpush1.msra.mxu0 %v663
    %695 = vmatprep.subr.mxu0 0.0
    %696 = vmatpush1.msra.mxu0 %v661
    %697 = vmatprep.subr.mxu0 0.0
    %698 = vmatpush1.msra.mxu0 %v659
    %699 = vmatprep.subr.mxu0 0.0
    %700 = vmatpush2.msra.mxu0 0.0
    %701 = vmatprep.subr.mxu0 0.0
    %702 = vmatpush2.msra.mxu0 0.0
    %703 = vmatprep.subr.mxu0 0.0
    %704 = vmatpush2.msra.mxu0 0.0
    %705 = vmatprep.subr.mxu0 0.0
    %706 = vmatpush2.msra.mxu0 0.0
    %707 = vmatprep.subr.mxu0 0.0
    %708 = vmatpush2.msra.mxu0 0.0
    %709 = vmatprep.subr.mxu0 0.0
    %710 = vmatpush2.msra.mxu0 0.0
    %711 = vmatprep.subr.mxu0 0.0
    %712 = vmatpush2.msra.mxu0 0.0
    %713 = vmatprep.subr.mxu0 0.0
    %714 = vmatpush2.msra.mxu0 0.0
    %715 = vmatprep.subr.mxu0 0.0
    %716 = vmatpush2.msra.mxu0 0.0
    %717 = vmatprep.subr.mxu0 0.0
    %718 = vmatpush2.msra.mxu0 0.0
    %719 = vmatprep.subr.mxu0 0.0
    %720 = vmatpush2.msra.mxu0 0.0
    %721 = vmatprep.subr.mxu0 0.0
    %722 = vmatpush2.msra.mxu0 0.0
    %723 = vmatprep.subr.mxu0 0.0
    %724 = vmatpush2.msra.mxu0 0.0
    %725 = vmatprep.subr.mxu0 0.0
    %726 = vmatpush2.msra.mxu0 0.0
    %727 = vmatprep.subr.mxu0 0.0
    %728 = vmatpush2.msra.mxu0 0.0
    %729 = vmatprep.subr.mxu0 0.0
    %730 = vmatpush2.msra.mxu0 0.0
    %731 = vmatprep.mubr.f32.mxu0 0.0
    %732 = vmatmul.mubr.f32.gmra.mxu0 %v275
    %v733 = vpop.f32.mrf.mxu0
    %v734 = vadd.f32 %v263, %v733
    %v735 = vpop.f32.mrf.mxu0
    %736 = vdwg.mxu0
    %v737 = vmax.f32 %v734, 0.0
    %v738 = vmul.f32 %v737, %v51
    %739 = vrot.lane.b32.xlu0 %v738, 18
    %v740 = vpop.permute.xlu0 %739
    %v741 = vsel %vm145, %v740, %v738
    %742 = vrot.lane.b32.xlu0 %v741, 18
    %v743 = vpop.permute.xlu0 %742
    %v744 = vsel %vm145, %v743, %v738
    %746 = vrot.lane.b32.xlu0 %v738, 17
    %v747 = vpop.permute.xlu0 %746
    %749 = vrot.lane.b32.xlu0 %v744, 16
    %v750 = vpop.permute.xlu0 %749
    %751 = vrot.lane.b32.xlu0 %v744, 111
    %v752 = vpop.permute.xlu0 %751
    %753 = vrot.lane.b32.xlu0 %v747, 111
    %v754 = vpop.permute.xlu0 %753
    %755 = vrot.lane.b32.xlu0 %v750, 111
    %v756 = vpop.permute.xlu0 %755
    %760 = vmatprep.subr.mxu0 0.0
    %761 = vmatpush1.msra.mxu0 0.0
    %762 = vmatprep.subr.mxu0 0.0
    %763 = vmatpush1.msra.mxu0 0.0
    %764 = vmatprep.subr.mxu0 0.0
    %765 = vmatpush1.msra.mxu0 0.0
    %766 = vmatprep.subr.mxu0 0.0
    %767 = vmatpush1.msra.mxu0 0.0
    %768 = vmatprep.subr.mxu0 0.0
    %769 = vmatpush1.msra.mxu0 0.0
    %770 = vmatprep.subr.mxu0 0.0
    %771 = vmatpush1.msra.mxu0 0.0
    %772 = vmatprep.subr.mxu0 0.0
    %773 = vmatpush1.msra.mxu0 0.0
    %774 = vmatprep.subr.mxu0 0.0
    %775 = vmatpush1.msra.mxu0 0.0
    %776 = vmatprep.subr.mxu0 0.0
    %777 = vmatpush1.msra.mxu0 0.0
    %778 = vmatprep.subr.mxu0 0.0
    %779 = vmatpush1.msra.mxu0 0.0
    %780 = vmatprep.subr.mxu0 0.0
    %781 = vmatpush1.msra.mxu0 0.0
    %782 = vmatprep.subr.mxu0 0.0
    %783 = vmatpush1.msra.mxu0 0.0
    %784 = vmatprep.subr.mxu0 0.0
    %785 = vmatpush1.msra.mxu0 0.0
    %786 = vmatprep.subr.mxu0 0.0
    %787 = vmatpush1.msra.mxu0 %v756
    %788 = vmatprep.subr.mxu0 0.0
    %789 = vmatpush1.msra.mxu0 %v754
    %790 = vmatprep.subr.mxu0 0.0
    %791 = vmatpush1.msra.mxu0 %v752
    %792 = vmatprep.subr.mxu0 0.0
    %793 = vmatpush2.msra.mxu0 0.0
    %794 = vmatprep.subr.mxu0 0.0
    %795 = vmatpush2.msra.mxu0 0.0
    %796 = vmatprep.subr.mxu0 0.0
    %797 = vmatpush2.msra.mxu0 0.0
    %798 = vmatprep.subr.mxu0 0.0
    %799 = vmatpush2.msra.mxu0 0.0
    %800 = vmatprep.subr.mxu0 0.0
    %801 = vmatpush2.msra.mxu0 0.0
    %802 = vmatprep.subr.mxu0 0.0
    %803 = vmatpush2.msra.mxu0 0.0
    %804 = vmatprep.subr.mxu0 0.0
    %805 = vmatpush2.msra.mxu0 0.0
    %806 = vmatprep.subr.mxu0 0.0
    %807 = vmatpush2.msra.mxu0 0.0
    %808 = vmatprep.subr.mxu0 0.0
    %809 = vmatpush2.msra.mxu0 0.0
    %810 = vmatprep.subr.mxu0 0.0
    %811 = vmatpush2.msra.mxu0 0.0
    %812 = vmatprep.subr.mxu0 0.0
    %813 = vmatpush2.msra.mxu0 0.0
    %814 = vmatprep.subr.mxu0 0.0
    %815 = vmatpush2.msra.mxu0 0.0
    %816 = vmatprep.subr.mxu0 0.0
    %817 = vmatpush2.msra.mxu0 0.0
    %818 = vmatprep.subr.mxu0 0.0
    %819 = vmatpush2.msra.mxu0 0.0
    %820 = vmatprep.subr.mxu0 0.0
    %821 = vmatpush2.msra.mxu0 0.0
    %822 = vmatprep.subr.mxu0 0.0
    %823 = vmatpush2.msra.mxu0 0.0
    %824 = vmatprep.mubr.f32.mxu0 0.0
    %825 = vmatmul.mubr.f32.gmra.mxu0 %v381
    %v826 = vpop.f32.mrf.mxu0
    %v827 = vadd.f32 %v364, %v826
    %v828 = vpop.f32.mrf.mxu0
    %829 = vmatprep.mubr.f32.mxu0 0.0
    %830 = vmatmul.mubr.f32.gmra.mxu0 %v384
    %v831 = vpop.f32.mrf.mxu0
    %v832 = vadd.f32 %v369, %v831
    %v833 = vpop.f32.mrf.mxu0
    %834 = vdwg.mxu0
    %v835 = vadd.f32 %v827, %v545
    %v836 = vadd.f32 %v832, %v550
    %v837 = vmax.f32 %v835, 0.0
    %v838 = vmax.f32 %v836, 0.0
    %841 = vrot.lane.b32.xlu0 %v837, 127
    %v842 = vpop.permute.xlu0 %841
    %843 = vrot.lane.b32.xlu0 %v838, 127
    %v844 = vpop.permute.xlu0 %843
    %s847 = scalar_lea.vmem [#allocation2], 16
    %848 = vst.msk [vmem:[%s847] sm:$0xff] %vm473, %v842
    %849 = vst.msk [vmem:[%s847 + $0x8] sm:$0xff] %vm473, %v844
    // Predicated region
    $region38: #{tpu_custom_call.1} parent=1 // pred_check
      _
    $region39: #{tpu_custom_call.1} parent=1 // pred_check_branch
      %851 = sbr.rel (0) target = $region41
    $region40: #{tpu_custom_call.1} parent=1 // pred_region
      %s853 = ssub.s32 512, 512
      %854 = vsyncadd [#allocation3], %s853
      %s855 = sshll.u32 [#allocation2], 4
      %s856 = int_to_ptr.vmem [resolvable:$true] %s855
      %861 = dma.vmem_to_hbm [thread:$0]  %s856, 512, %s9, [#allocation3], 128, 128, 8
    $region41: #{tpu_custom_call.1} parent=1 // pred_fallthru
      _
    // Predicated region
    $region42: #{tpu_custom_call.1} parent=1 // pred_check
      _
    $region43: #{tpu_custom_call.1} parent=1 // pred_check_branch
      %863 = sbr.rel (0) target = $region45
    $region44: #{tpu_custom_call.1} parent=1 // pred_region
      %864 = dma.done [#allocation3], 512
    $region45: #{tpu_custom_call.1} parent=1 // pred_fallthru
      _
    %865 = vsyncpa [#allocation3], 1

</llo_original>
